<compile_context>
chip_gen: v7x
topology: tpu7x:2x2x1
jax: 0.10.0
libtpu: 0.0.40
codegen_flags: <defaults>
</compile_context>

<pallas_src>
import jax
import jax.numpy as jnp
from jax.experimental import pallas as pl
from jax.experimental.pallas import tpu as pltpu

# ---- model sizes (small, consistent with the module's structure) ----
NUM_SAMPLES = 2
NUM_BATCH   = 8
NUM_DIGITS  = 10
NUM_STYLE   = 22                      # num_style + num_digits = 32
NUM_IN      = NUM_DIGITS + NUM_STYLE  # 32
NUM_HIDDEN2 = 32
NUM_HIDDEN1 = 64
NUM_PIXELS  = 128
EPS = 1e-9                            # only used by the PyTorch-formula reference


def decoder_kernel(x_ref, img_ref,
                   w1_ref, b1_ref, w2_ref, b2_ref, w3_ref, b3_ref,
                   mean_ref, bce_ref):
    # dec_hidden: Linear -> ReLU -> Linear -> ReLU.
    # bf16 operands on the MXU, f32 accumulation; biases added in f32.
    h1 = jnp.dot(x_ref[...], w1_ref[...],
                 preferred_element_type=jnp.float32) + b1_ref[...]
    h1 = jnp.maximum(h1, 0.0)
    h2 = jnp.dot(h1.astype(jnp.bfloat16), w2_ref[...],
                 preferred_element_type=jnp.float32) + b2_ref[...]
    h2 = jnp.maximum(h2, 0.0)

    # dec_images: Linear -> Sigmoid.
    z = jnp.dot(h2.astype(jnp.bfloat16), w3_ref[...],
                preferred_element_type=jnp.float32) + b3_ref[...]
    s = jax.nn.sigmoid(z)                       # 1 EUP transcendental / pixel
    mean_ref[...] = s.astype(mean_ref.dtype)    # bf16 store halves output HBM

    # binary_cross_entropy(sigmoid(z), img).sum(-1), from the logits, reusing s:
    #   -(y*log s + (1-y)*log(1-s)) == max(z,0) - z*y - log(max(s, 1-s))
    # (log(max(s,1-s)) == -log(1+exp(-|z|)): saturation-stable, no EPS, and one
    #  log instead of log+exp -> 2 transcendentals/pixel total incl. sigmoid).
    img = img_ref[...]
    bce_elem = (jnp.maximum(z, 0.0) - z * img
                - jnp.log(jnp.maximum(s, 1.0 - s)))
    # Lane-dense row-sum on the MXU: (1,P) x (TM,P)^T -> (1,TM), so bce is
    # written as a lane-dense row instead of a 1-lane-wide masked vst.msk
    # column (the store-side lever that matters once M scales).
    ones_row = jnp.ones((1, NUM_PIXELS), jnp.float32)
    bce_ref[...] = jax.lax.dot_general(
        ones_row, bce_elem,
        dimension_numbers=(((1,), (1,)), ((), ())),
        preferred_element_type=jnp.float32)


def _choose_tm(m):
    """Row-tile size.  Demo size -> single resident block; at scale, big tiles
    amortize the ~0.35us/step overhead while keeping >= 2 grid steps so the
    'parallel' axis can shard across both v7x TensorCores."""
    if m <= 128:
        return m
    tm = min(1024, (pl.cdiv(m, 2) // 16) * 16)   # multiple of 16 (bf16 sublanes)
    return max(128, tm)


def decoder_forward(digits, styles, images, params):
    """digits: (S, B, num_digits); styles: (S, B, num_style);
    images: (S, B, num_pixels).  Returns (images_mean[bf16], bce[f32])."""
    S, B, _ = digits.shape
    M = S * B
    # Concat fused in the wrapper into a single (M, 32) bf16 activation: one
    # MXU dot and one input DMA stream for layer 1.
    x = jnp.concatenate([digits, styles], axis=-1).reshape(M, NUM_IN)
    x = x.astype(jnp.bfloat16)
    img = images.reshape(M, NUM_PIXELS)          # targets kept f32 for BCE

    w1, b1, w2, b2, w3, b3 = params
    w1, w2, w3 = (w.astype(jnp.bfloat16) for w in (w1, w2, w3))

    TM = _choose_tm(M)
    G = pl.cdiv(M, TM)
    grid = (G,)

    def row(d):                                  # M-tiled activations
        return pl.BlockSpec((TM, d), lambda i: (i, 0))

    def resident(shape):                         # weights/biases stay in VMEM
        return pl.BlockSpec(shape, lambda i: (0, 0))

    in_specs = [
        row(NUM_IN), row(NUM_PIXELS),
        resident(w1.shape), resident(b1.shape),
        resident(w2.shape), resident(b2.shape),
        resident(w3.shape), resident(b3.shape),
    ]
    out_specs = (row(NUM_PIXELS),
                 pl.BlockSpec((1, TM), lambda i: (i, 0)))    # lane-dense bce

    # Advisory cost estimate so XLA can schedule/overlap this tiny call.
    matmul_flops = 2 * M * (NUM_IN * NUM_HIDDEN2 + NUM_HIDDEN2 * NUM_HIDDEN1
                            + NUM_HIDDEN1 * NUM_PIXELS + NUM_PIXELS)
    ew_flops = 8 * M * NUM_PIXELS
    weight_bytes = (2 * (NUM_IN * NUM_HIDDEN2 + NUM_HIDDEN2 * NUM_HIDDEN1
                         + NUM_HIDDEN1 * NUM_PIXELS)
                    + 4 * (NUM_HIDDEN2 + NUM_HIDDEN1 + NUM_PIXELS))
    io_bytes = M * (2 * NUM_IN + 4 * NUM_PIXELS + 2 * NUM_PIXELS + 4)
    cost = pl.CostEstimate(flops=matmul_flops + ew_flops,
                           transcendentals=2 * M * NUM_PIXELS,
                           bytes_accessed=weight_bytes + io_bytes)

    mean2d, bce2d = pl.pallas_call(
        decoder_kernel,
        grid=grid,
        in_specs=in_specs,
        out_specs=out_specs,
        out_shape=(jax.ShapeDtypeStruct((M, NUM_PIXELS), jnp.bfloat16),
                   jax.ShapeDtypeStruct((G, TM), jnp.float32)),
        compiler_params=pltpu.CompilerParams(
            dimension_semantics=("parallel",)),   # shards grid steps across TCs
        cost_estimate=cost,
    )(x, img, w1, b1, w2, b2, w3, b3)

    images_mean = mean2d.reshape(S, B, NUM_PIXELS)
    bce = bce2d.reshape(-1)[:M].reshape(S, B)     # drop tail padding if M % TM
    return images_mean, bce


def init_params(key):
    """Deterministic PyTorch-style init; weights (in, out) f32, biases (1, out) f32.
    (Weights are cast to bf16 at the pallas_call boundary.)"""
    k1, k2, k3 = jax.random.split(key, 3)

    def lin(k, fan_in, fan_out):
        bound = 1.0 / jnp.sqrt(fan_in)
        kw, kb = jax.random.split(k)
        w = jax.random.uniform(kw, (fan_in, fan_out), jnp.float32, -bound, bound)
        b = jax.random.uniform(kb, (1, fan_out), jnp.float32, -bound, bound)
        return w, b

    w1, b1 = lin(k1, NUM_IN, NUM_HIDDEN2)
    w2, b2 = lin(k2, NUM_HIDDEN2, NUM_HIDDEN1)
    w3, b3 = lin(k3, NUM_HIDDEN1, NUM_PIXELS)
    return (w1, b1, w2, b2, w3, b3)


if __name__ == "__main__":
    # TODO(synk): probtorch Trace / concrete & normal prior log-prob bookkeeping
    # has no Pallas equivalent; digits (q['y']) and styles (q['z']) are inputs.
    key = jax.random.PRNGKey(0)
    kp, kd, ks, ki = jax.random.split(key, 4)

    params = init_params(kp)
    digits = jax.nn.softmax(
        jax.random.normal(kd, (NUM_SAMPLES, NUM_BATCH, NUM_DIGITS), jnp.float32), axis=-1)
    styles = jax.random.normal(ks, (NUM_SAMPLES, NUM_BATCH, NUM_STYLE), jnp.float32)
    images = jax.random.uniform(ki, (NUM_SAMPLES, NUM_BATCH, NUM_PIXELS), jnp.float32)

    images_mean, bce = decoder_forward(digits, styles, images, params)
    jax.block_until_ready((images_mean, bce))

    # ---- plain-JAX reference checks ----
    M = NUM_SAMPLES * NUM_BATCH
    w1, b1, w2, b2, w3, b3 = params
    x = jnp.concatenate([digits, styles], -1).reshape(M, NUM_IN)
    img2d = images.reshape(M, NUM_PIXELS)
    got_mean = images_mean.reshape(M, NUM_PIXELS).astype(jnp.float32)
    got_bce = bce.reshape(-1)

    # (a) bf16-mirror of the kernel compute path (tight tolerance)
    xb = x.astype(jnp.bfloat16)
    w1b, w2b, w3b = (w.astype(jnp.bfloat16) for w in (w1, w2, w3))
    h = jnp.maximum(jnp.dot(xb, w1b, preferred_element_type=jnp.float32) + b1, 0.0)
    h = jnp.maximum(jnp.dot(h.astype(jnp.bfloat16), w2b,
                            preferred_element_type=jnp.float32) + b2, 0.0)
    zb = jnp.dot(h.astype(jnp.bfloat16), w3b,
                 preferred_element_type=jnp.float32) + b3
    ref_mean_b = jax.nn.sigmoid(zb)
    ref_bce_b = (jnp.maximum(zb, 0.0) - zb * img2d
                 + jnp.log1p(jnp.exp(-jnp.abs(zb)))).sum(-1)
    assert jnp.allclose(got_mean, ref_mean_b, atol=1e-2)
    assert jnp.allclose(got_bce, ref_bce_b, atol=1e-2, rtol=1e-3)

    # (b) original f32 / EPS PyTorch formulation (looser: bf16 matmul operands)
    hf = jnp.maximum(x @ w1 + b1, 0.0)
    hf = jnp.maximum(hf @ w2 + b2, 0.0)
    zf = hf @ w3 + b3
    ref_mean_f = jax.nn.sigmoid(zf)
    ref_bce_f = -(jnp.log(ref_mean_f + EPS) * img2d
                  + jnp.log(1.0 - ref_mean_f + EPS) * (1.0 - img2d)).sum(-1)
    assert jnp.allclose(got_mean, ref_mean_f, atol=5e-2)
    assert jnp.allclose(got_bce, ref_bce_f, rtol=3e-2, atol=1.0)

    print("KERNEL_OK")
</pallas_src>

<mosaic_0001>
module attributes {stable_mosaic.version = 11 : i64} {
  func.func @decoder_kernel(%arg0: i32, %arg1: memref<16x32xbf16, #tpu.memory_space<vmem>>, %arg2: memref<16x128xf32, #tpu.memory_space<vmem>>, %arg3: memref<32x32xbf16, #tpu.memory_space<vmem>>, %arg4: memref<1x32xf32, #tpu.memory_space<vmem>>, %arg5: memref<32x64xbf16, #tpu.memory_space<vmem>>, %arg6: memref<1x64xf32, #tpu.memory_space<vmem>>, %arg7: memref<64x128xbf16, #tpu.memory_space<vmem>>, %arg8: memref<1x128xf32, #tpu.memory_space<vmem>>, %arg9: memref<16x128xbf16, #tpu.memory_space<vmem>>, %arg10: memref<1x16xf32, #tpu.memory_space<vmem>>) attributes {dimension_semantics = [#tpu.dimension_semantics<parallel>], iteration_bounds = array<i64: 1>, scalar_prefetch = 0 : i64, scratch_operands = 0 : i64, tpu.core_type = #tpu.core_type<tc>, window_params = [{transform_indices = @transform_0, window_bounds = array<i64: 16, 32>}, {transform_indices = @transform_1, window_bounds = array<i64: 16, 128>}, {pipeline_mode = #tpu.pipeline_mode<synchronous>, transform_indices = @transform_2, window_bounds = array<i64: 32, 32>}, {pipeline_mode = #tpu.pipeline_mode<synchronous>, transform_indices = @transform_3, window_bounds = array<i64: 1, 32>}, {pipeline_mode = #tpu.pipeline_mode<synchronous>, transform_indices = @transform_4, window_bounds = array<i64: 32, 64>}, {pipeline_mode = #tpu.pipeline_mode<synchronous>, transform_indices = @transform_5, window_bounds = array<i64: 1, 64>}, {pipeline_mode = #tpu.pipeline_mode<synchronous>, transform_indices = @transform_6, window_bounds = array<i64: 64, 128>}, {pipeline_mode = #tpu.pipeline_mode<synchronous>, transform_indices = @transform_7, window_bounds = array<i64: 1, 128>}, {transform_indices = @transform_8, window_bounds = array<i64: 16, 128>}, {transform_indices = @transform_9, window_bounds = array<i64: 1, 16>}]} {
    %c0 = arith.constant 0 : index
    %c0_0 = arith.constant 0 : index
    %0 = vector.load %arg1[%c0, %c0_0] : memref<16x32xbf16, #tpu.memory_space<vmem>>, vector<16x32xbf16>
    %c0_1 = arith.constant 0 : index
    %c0_2 = arith.constant 0 : index
    %1 = vector.load %arg3[%c0_1, %c0_2] : memref<32x32xbf16, #tpu.memory_space<vmem>>, vector<32x32xbf16>
    %cst = arith.constant dense<0.000000e+00> : vector<16x32xf32>
    %2 = tpu.matmul %0, %1, %cst {dimension_numbers = #tpu.dot_dimension_numbers<[1], [0], [0], [1], [0, 0, 1, 1], [], []>} : vector<16x32xbf16>, vector<32x32xbf16>, vector<16x32xf32> -> vector<16x32xf32>
    %c0_3 = arith.constant 0 : index
    %c0_4 = arith.constant 0 : index
    %3 = vector.load %arg4[%c0_3, %c0_4] : memref<1x32xf32, #tpu.memory_space<vmem>>, vector<1x32xf32>
    %4 = vector.broadcast %3 : vector<1x32xf32> to vector<16x32xf32>
    %5 = arith.addf %2, %4 : vector<16x32xf32>
    %cst_5 = arith.constant 0.000000e+00 : f32
    %6 = vector.broadcast %cst_5 : f32 to vector<16x32xf32>
    %7 = arith.maximumf %5, %6 : vector<16x32xf32>
    %8 = arith.truncf %7 : vector<16x32xf32> to vector<16x32xbf16>
    %c0_6 = arith.constant 0 : index
    %c0_7 = arith.constant 0 : index
    %9 = vector.load %arg5[%c0_6, %c0_7] : memref<32x64xbf16, #tpu.memory_space<vmem>>, vector<32x64xbf16>
    %cst_8 = arith.constant dense<0.000000e+00> : vector<16x64xf32>
    %10 = tpu.matmul %8, %9, %cst_8 {dimension_numbers = #tpu.dot_dimension_numbers<[1], [0], [0], [1], [0, 0, 1, 1], [], []>} : vector<16x32xbf16>, vector<32x64xbf16>, vector<16x64xf32> -> vector<16x64xf32>
    %c0_9 = arith.constant 0 : index
    %c0_10 = arith.constant 0 : index
    %11 = vector.load %arg6[%c0_9, %c0_10] : memref<1x64xf32, #tpu.memory_space<vmem>>, vector<1x64xf32>
    %12 = vector.broadcast %11 : vector<1x64xf32> to vector<16x64xf32>
    %13 = arith.addf %10, %12 : vector<16x64xf32>
    %cst_11 = arith.constant 0.000000e+00 : f32
    %14 = vector.broadcast %cst_11 : f32 to vector<16x64xf32>
    %15 = arith.maximumf %13, %14 : vector<16x64xf32>
    %16 = arith.truncf %15 : vector<16x64xf32> to vector<16x64xbf16>
    %c0_12 = arith.constant 0 : index
    %c0_13 = arith.constant 0 : index
    %17 = vector.load %arg7[%c0_12, %c0_13] : memref<64x128xbf16, #tpu.memory_space<vmem>>, vector<64x128xbf16>
    %cst_14 = arith.constant dense<0.000000e+00> : vector<16x128xf32>
    %18 = tpu.matmul %16, %17, %cst_14 {dimension_numbers = #tpu.dot_dimension_numbers<[1], [0], [0], [1], [0, 0, 1, 1], [], []>} : vector<16x64xbf16>, vector<64x128xbf16>, vector<16x128xf32> -> vector<16x128xf32>
    %c0_15 = arith.constant 0 : index
    %c0_16 = arith.constant 0 : index
    %19 = vector.load %arg8[%c0_15, %c0_16] : memref<1x128xf32, #tpu.memory_space<vmem>>, vector<1x128xf32>
    %20 = vector.broadcast %19 : vector<1x128xf32> to vector<16x128xf32>
    %21 = arith.addf %18, %20 : vector<16x128xf32>
    %22 = arith.negf %21 : vector<16x128xf32>
    %23 = math.exp %22 : vector<16x128xf32>
    %cst_17 = arith.constant 1.000000e+00 : f32
    %24 = vector.broadcast %cst_17 : f32 to vector<16x128xf32>
    %25 = arith.addf %24, %23 : vector<16x128xf32>
    %26 = arith.divf %24, %25 : vector<16x128xf32>
    %27 = arith.truncf %26 : vector<16x128xf32> to vector<16x128xbf16>
    %c0_18 = arith.constant 0 : index
    %c0_19 = arith.constant 0 : index
    %28 = vector.load %arg9[%c0_18, %c0_19] : memref<16x128xbf16, #tpu.memory_space<vmem>>, vector<16x128xbf16>
    tpu.vector_store %arg9[%c0_18, %c0_19], %27 {strides = array<i32>} : memref<16x128xbf16, #tpu.memory_space<vmem>>, vector<16x128xbf16>,
    %c0_20 = arith.constant 0 : index
    %c0_21 = arith.constant 0 : index
    %29 = vector.load %arg2[%c0_20, %c0_21] : memref<16x128xf32, #tpu.memory_space<vmem>>, vector<16x128xf32>
    %cst_22 = arith.constant 0.000000e+00 : f32
    %30 = vector.broadcast %cst_22 : f32 to vector<16x128xf32>
    %31 = arith.maximumf %21, %30 : vector<16x128xf32>
    %32 = arith.mulf %21, %29 : vector<16x128xf32>
    %33 = arith.subf %31, %32 : vector<16x128xf32>
    %cst_23 = arith.constant 1.000000e+00 : f32
    %34 = vector.broadcast %cst_23 : f32 to vector<16x128xf32>
    %35 = arith.subf %34, %26 : vector<16x128xf32>
    %36 = arith.maximumf %26, %35 : vector<16x128xf32>
    %37 = math.log %36 : vector<16x128xf32>
    %38 = arith.subf %33, %37 : vector<16x128xf32>
    %cst_24 = arith.constant 1.000000e+00 : f32
    %39 = vector.broadcast %cst_24 : f32 to vector<1x128xf32>
    %cst_25 = arith.constant dense<0.000000e+00> : vector<1x16xf32>
    %40 = tpu.matmul %39, %38, %cst_25 {dimension_numbers = #tpu.dot_dimension_numbers<[1], [1], [0], [0], [0, 0, 1, 0], [], []>} : vector<1x128xf32>, vector<16x128xf32>, vector<1x16xf32> -> vector<1x16xf32>
    %c0_26 = arith.constant 0 : index
    %c0_27 = arith.constant 0 : index
    %41 = vector.load %arg10[%c0_26, %c0_27] : memref<1x16xf32, #tpu.memory_space<vmem>>, vector<1x16xf32>
    tpu.vector_store %arg10[%c0_26, %c0_27], %40 {strides = array<i32>} : memref<1x16xf32, #tpu.memory_space<vmem>>, vector<1x16xf32>,
    return
  }
  func.func @transform_0(%arg0: i32) -> (i32, i32) {
    %c0_i32 = arith.constant 0 : i32
    %c0_i32_0 = arith.constant 0 : i32
    return %arg0, %c0_i32 : i32, i32
  }
  func.func @transform_1(%arg0: i32) -> (i32, i32) {
    %c0_i32 = arith.constant 0 : i32
    %c0_i32_0 = arith.constant 0 : i32
    return %arg0, %c0_i32 : i32, i32
  }
  func.func @transform_2(%arg0: i32) -> (i32, i32) {
    %c0_i32 = arith.constant 0 : i32
    %c0_i32_0 = arith.constant 0 : i32
    %c0_i32_1 = arith.constant 0 : i32
    return %c0_i32, %c0_i32_0 : i32, i32
  }
  func.func @transform_3(%arg0: i32) -> (i32, i32) {
    %c0_i32 = arith.constant 0 : i32
    %c0_i32_0 = arith.constant 0 : i32
    %c0_i32_1 = arith.constant 0 : i32
    return %c0_i32, %c0_i32_0 : i32, i32
  }
  func.func @transform_4(%arg0: i32) -> (i32, i32) {
    %c0_i32 = arith.constant 0 : i32
    %c0_i32_0 = arith.constant 0 : i32
    %c0_i32_1 = arith.constant 0 : i32
    return %c0_i32, %c0_i32_0 : i32, i32
  }
  func.func @transform_5(%arg0: i32) -> (i32, i32) {
    %c0_i32 = arith.constant 0 : i32
    %c0_i32_0 = arith.constant 0 : i32
    %c0_i32_1 = arith.constant 0 : i32
    return %c0_i32, %c0_i32_0 : i32, i32
  }
  func.func @transform_6(%arg0: i32) -> (i32, i32) {
    %c0_i32 = arith.constant 0 : i32
    %c0_i32_0 = arith.constant 0 : i32
    %c0_i32_1 = arith.constant 0 : i32
    return %c0_i32, %c0_i32_0 : i32, i32
  }
  func.func @transform_7(%arg0: i32) -> (i32, i32) {
    %c0_i32 = arith.constant 0 : i32
    %c0_i32_0 = arith.constant 0 : i32
    %c0_i32_1 = arith.constant 0 : i32
    return %c0_i32, %c0_i32_0 : i32, i32
  }
  func.func @transform_8(%arg0: i32) -> (i32, i32) {
    %c0_i32 = arith.constant 0 : i32
    %c0_i32_0 = arith.constant 0 : i32
    return %arg0, %c0_i32 : i32, i32
  }
  func.func @transform_9(%arg0: i32) -> (i32, i32) {
    %c0_i32 = arith.constant 0 : i32
    %c0_i32_0 = arith.constant 0 : i32
    return %arg0, %c0_i32 : i32, i32
  }
}

</mosaic_0001>

<llo_original>
// kernel: tpu_custom_call.1
$region0: #{tpu_custom_call.1}
  #allocation0 [shape = 'u32[]', space=smem, size = 0x4, offset = 0x4, fixed_abs, tag = 'smem constant byte address 0x4 - core index']
  #allocation1 [shape = 'u32[144,128]{1,0:T(1,128)}', space=vmem, size = 0x12000, scoped, tag = 'internal scratch']
  %s0 = inlined_call_operand.hbm [shape: bf16[16,32], index: 0, kind: input, shape index: {}]
  %s1 = inlined_call_operand.hbm [shape: f32[16,128], index: 1, kind: input, shape index: {}]
  %s2 = inlined_call_operand.hbm [shape: bf16[32,32], index: 2, kind: input, shape index: {}]
  %s3 = inlined_call_operand.vmem [shape: f32[1,32], index: 3, kind: input, shape index: {}]
  %s4 = inlined_call_operand.hbm [shape: bf16[32,64], index: 4, kind: input, shape index: {}]
  %s5 = inlined_call_operand.vmem [shape: f32[1,64], index: 5, kind: input, shape index: {}]
  %s6 = inlined_call_operand.hbm [shape: bf16[64,128], index: 6, kind: input, shape index: {}]
  %s7 = inlined_call_operand.vmem [shape: f32[1,128], index: 7, kind: input, shape index: {}]
  %s8 = inlined_call_operand.hbm [shape: bf16[16,128], index: 8, kind: output, shape index: {0}]
  %s9 = inlined_call_operand.hbm [shape: f32[1,16], index: 9, kind: output, shape index: {1}]
  %10 = xla_tuple %s8, %s9
  %s11 = sld [smem:[#allocation0]]
  $region70: #{tpu_custom_call.1} parent=0
    _
  %s13 = ssub.s32 1, %s11
  %s14 = scalar_select 0, %s13, %s11
  $region1: #{tpu_custom_call.1} parent=0
    #allocation2 [shape = 'u8[4096]{0}', space=vmem, size = 0x1000, scoped, tag = 'input window, operand 0, single buffered']
    #allocation3 [shape = 's32[1]{0}', space=sflag, size = 0x4, scoped, tag = 'scoped memory for tpu_custom_call.1']
    #allocation4 [shape = 's32[1]{0}', space=sflag, size = 0x4, scoped, tag = 'scoped memory for tpu_custom_call.1']
    #allocation5 [shape = 'u8[8192]{0}', space=vmem, size = 0x2000, scoped, tag = 'input window, operand 1, single buffered']
    #allocation6 [shape = 's32[1]{0}', space=sflag, size = 0x4, scoped, tag = 'scoped memory for tpu_custom_call.1']
    #allocation7 [shape = 'u8[8192]{0}', space=vmem, size = 0x2000, scoped, tag = 'input window, operand 2, single buffered']
    #allocation8 [shape = 'u8[8192]{0}', space=vmem, size = 0x2000, scoped, tag = 'input window, operand 4, single buffered']
    #allocation9 [shape = 's32[1]{0}', space=sflag, size = 0x4, scoped, tag = 'scoped memory for tpu_custom_call.1']
    #allocation10 [shape = 'u8[16384]{0}', space=vmem, size = 0x4000, scoped, tag = 'input window, operand 6, single buffered']
    #allocation11 [shape = 'u8[4096]{0}', space=vmem, size = 0x1000, scoped, tag = 'output window, operand 0, single buffered']
    #allocation12 [shape = 'u8[512]{0}', space=vmem, size = 0x400, scoped, tag = 'output window, operand 1, single buffered']
    #allocation13 [shape = 's32[1]{0}', space=sflag, size = 0x4, scoped, tag = 'scoped memory for tpu_custom_call.1']
    %15 = vsyncpa [#allocation3], 0
    %16 = vsyncpa [#allocation6], 0
    %17 = vsyncpa [#allocation9], 0
    %18 = vsyncpa [#allocation4], 0
    %19 = vsyncpa [#allocation13], 0
    // Predicated region
    $region2: #{tpu_custom_call.1} parent=1 // pred_check
      _
    $region3: #{tpu_custom_call.1} parent=1 // pred_check_branch
      %21 = sbr.rel (0) target = $region5
    $region4: #{tpu_custom_call.1} parent=1 // pred_region
      %s23 = ssub.s32 128, 128
      %24 = vsyncadd [#allocation3], %s23
      %s25 = sshll.u32 [#allocation2], 4
      %s26 = int_to_ptr.vmem [resolvable:$true] %s25
      %31 = dma.hbm_to_vmem [thread:$0]  %s0, 128, %s26, [#allocation3], 64, 64, 4
    $region5: #{tpu_custom_call.1} parent=1 // pred_fallthru
      _
    // Predicated region
    $region6: #{tpu_custom_call.1} parent=1 // pred_check
      _
    $region7: #{tpu_custom_call.1} parent=1 // pred_check_branch
      %33 = sbr.rel (0) target = $region9
    $region8: #{tpu_custom_call.1} parent=1 // pred_region
      %s35 = ssub.s32 256, 256
      %36 = vsyncadd [#allocation6], %s35
      %s37 = sshll.u32 [#allocation5], 4
      %s38 = int_to_ptr.vmem [resolvable:$true] %s37
      %43 = dma.hbm_to_vmem [thread:$0]  %s1, 256, %s38, [#allocation6], 128, 128, 8
    $region9: #{tpu_custom_call.1} parent=1 // pred_fallthru
      _
    // Predicated region
    $region10: #{tpu_custom_call.1} parent=1 // pred_check
      _
    $region11: #{tpu_custom_call.1} parent=1 // pred_check_branch
      %45 = sbr.rel (0) target = $region13
    $region12: #{tpu_custom_call.1} parent=1 // pred_region
      %s47 = ssub.s32 256, 256
      %48 = vsyncadd [#allocation6], %s47
      %s49 = sshll.u32 [#allocation7], 4
      %s50 = int_to_ptr.vmem [resolvable:$true] %s49
      %55 = dma.hbm_to_vmem [thread:$0]  %s2, 256, %s50, [#allocation6], 64, 64, 4
    $region13: #{tpu_custom_call.1} parent=1 // pred_fallthru
      _
    // Predicated region
    $region14: #{tpu_custom_call.1} parent=1 // pred_check
      _
    $region15: #{tpu_custom_call.1} parent=1 // pred_check_branch
      %57 = sbr.rel (0) target = $region17
    $region16: #{tpu_custom_call.1} parent=1 // pred_region
      _
    $region17: #{tpu_custom_call.1} parent=1 // pred_fallthru
      _
    // Predicated region
    $region18: #{tpu_custom_call.1} parent=1 // pred_check
      _
    $region19: #{tpu_custom_call.1} parent=1 // pred_check_branch
      %59 = sbr.rel (0) target = $region21
    $region20: #{tpu_custom_call.1} parent=1 // pred_region
      %s61 = ssub.s32 256, 256
      %62 = vsyncadd [#allocation9], %s61
      %s63 = sshll.u32 [#allocation8], 4
      %s64 = int_to_ptr.vmem [resolvable:$true] %s63
      %69 = dma.hbm_to_vmem [thread:$0]  %s4, 256, %s64, [#allocation9], 64, 64, 4
    $region21: #{tpu_custom_call.1} parent=1 // pred_fallthru
      _
    // Predicated region
    $region22: #{tpu_custom_call.1} parent=1 // pred_check
      _
    $region23: #{tpu_custom_call.1} parent=1 // pred_check_branch
      %71 = sbr.rel (0) target = $region25
    $region24: #{tpu_custom_call.1} parent=1 // pred_region
      _
    $region25: #{tpu_custom_call.1} parent=1 // pred_fallthru
      _
    // Predicated region
    $region26: #{tpu_custom_call.1} parent=1 // pred_check
      _
    $region27: #{tpu_custom_call.1} parent=1 // pred_check_branch
      %73 = sbr.rel (0) target = $region29
    $region28: #{tpu_custom_call.1} parent=1 // pred_region
      %s75 = ssub.s32 512, 512
      %76 = vsyncadd [#allocation9], %s75
      %s77 = sshll.u32 [#allocation10], 4
      %s78 = int_to_ptr.vmem [resolvable:$true] %s77
      %83 = dma.hbm_to_vmem [thread:$0]  %s6, 512, %s78, [#allocation9], 64, 64, 4
    $region29: #{tpu_custom_call.1} parent=1 // pred_fallthru
      _
    // Predicated region
    $region30: #{tpu_custom_call.1} parent=1 // pred_check
      _
    $region31: #{tpu_custom_call.1} parent=1 // pred_check_branch
      %85 = sbr.rel (0) target = $region33
    $region32: #{tpu_custom_call.1} parent=1 // pred_region
      _
    $region33: #{tpu_custom_call.1} parent=1 // pred_fallthru
      _
    // Predicated region
    $region34: #{tpu_custom_call.1} parent=1 // pred_check
      _
    $region35: #{tpu_custom_call.1} parent=1 // pred_check_branch
      %87 = sbr.rel (0) target = $region37
    $region36: #{tpu_custom_call.1} parent=1 // pred_region
      %88 = dma.done [#allocation3], 128
    $region37: #{tpu_custom_call.1} parent=1 // pred_fallthru
      _
    // Predicated region
    $region38: #{tpu_custom_call.1} parent=1 // pred_check
      _
    $region39: #{tpu_custom_call.1} parent=1 // pred_check_branch
      %90 = sbr.rel (0) target = $region41
    $region40: #{tpu_custom_call.1} parent=1 // pred_region
      %91 = dma.done [#allocation6], 256
    $region41: #{tpu_custom_call.1} parent=1 // pred_fallthru
      _
    // Predicated region
    $region42: #{tpu_custom_call.1} parent=1 // pred_check
      _
    $region43: #{tpu_custom_call.1} parent=1 // pred_check_branch
      %93 = sbr.rel (0) target = $region45
    $region44: #{tpu_custom_call.1} parent=1 // pred_region
      %94 = dma.done [#allocation6], 256
    $region45: #{tpu_custom_call.1} parent=1 // pred_fallthru
      _
    // Predicated region
    $region46: #{tpu_custom_call.1} parent=1 // pred_check
      _
    $region47: #{tpu_custom_call.1} parent=1 // pred_check_branch
      %96 = sbr.rel (0) target = $region49
    $region48: #{tpu_custom_call.1} parent=1 // pred_region
      %97 = dma.done [#allocation9], 256
    $region49: #{tpu_custom_call.1} parent=1 // pred_fallthru
      _
    // Predicated region
    $region50: #{tpu_custom_call.1} parent=1 // pred_check
      _
    $region51: #{tpu_custom_call.1} parent=1 // pred_check_branch
      %99 = sbr.rel (0) target = $region53
    $region52: #{tpu_custom_call.1} parent=1 // pred_region
      %100 = dma.done [#allocation9], 512
    $region53: #{tpu_custom_call.1} parent=1 // pred_fallthru
      _
    %v102 = vld [vmem:[#allocation2] sm:$0xf]
    %v103 = vld [vmem:[#allocation2 + $0x4] sm:$0xf]
    %v104 = vld [vmem:[#allocation7] sm:$0xf]
    %v105 = vld [vmem:[#allocation7 + $0x4] sm:$0xf]
    %v106 = vld [vmem:[#allocation7 + $0x8] sm:$0xf]
    %v107 = vld [vmem:[#allocation7 + $0xc] sm:$0xf]
    %v108 = vld [vmem:[%s3] sm:$0x1]
    %v110 = vlaneseq
    %v111 = vshrl.u32 %v110, 7
    %v112 = vsub.s32 0, %v111
    %v113 = vrot.slane %v108, %v112
    %v117 = vunpack.c.l.b16 %v102
    %v118 = vunpack.c.l.b16 %v103
    %v119 = vpack.c.b16 %v118, %v117
    %v124 = vunpack.c.l.b16 %v104
    %v125 = vunpack.c.l.b16 %v105
    %v126 = vunpack.c.l.b16 %v106
    %v127 = vunpack.c.l.b16 %v107
    %v128 = vpack.c.b16 %v125, %v124
    %v129 = vpack.c.b16 %v127, %v126
    %vm132 = vcmask 261120
    %v134 = vsel %vm132, %v119, 0
    %136 = vmatprep.subr.bf16.mxu0 0
    %137 = vmatpush1.bf16.msra.mxu0 %v128
    %138 = vmatprep.subr.bf16.mxu0 0
    %139 = vmatpush1.bf16.msra.mxu0 %v129
    %140 = vmatprep.subr.bf16.mxu0 0
    %141 = vmatpush1.bf16.msra.mxu0 0
    %142 = vmatprep.subr.bf16.mxu0 0
    %143 = vmatpush1.bf16.msra.mxu0 0
    %144 = vmatprep.subr.bf16.mxu0 0
    %145 = vmatpush1.bf16.msra.mxu0 0
    %146 = vmatprep.subr.bf16.mxu0 0
    %147 = vmatpush1.bf16.msra.mxu0 0
    %148 = vmatprep.subr.bf16.mxu0 0
    %149 = vmatpush1.bf16.msra.mxu0 0
    %150 = vmatprep.subr.bf16.mxu0 0
    %151 = vmatpush1.bf16.msra.mxu0 0
    %152 = vmatprep.subr.bf16.mxu0 0
    %153 = vmatpush1.bf16.msra.mxu0 0
    %154 = vmatprep.subr.bf16.mxu0 0
    %155 = vmatpush1.bf16.msra.mxu0 0
    %156 = vmatprep.subr.bf16.mxu0 0
    %157 = vmatpush1.bf16.msra.mxu0 0
    %158 = vmatprep.subr.bf16.mxu0 0
    %159 = vmatpush1.bf16.msra.mxu0 0
    %160 = vmatprep.subr.bf16.mxu0 0
    %161 = vmatpush1.bf16.msra.mxu0 0
    %162 = vmatprep.subr.bf16.mxu0 0
    %163 = vmatpush1.bf16.msra.mxu0 0
    %164 = vmatprep.subr.bf16.mxu0 0
    %165 = vmatpush1.bf16.msra.mxu0 0
    %166 = vmatprep.subr.bf16.mxu0 0
    %167 = vmatpush1.bf16.msra.mxu0 0
    %168 = vmatprep.mubr.bf16.mxu0 0
    %169 = vmatmul.mubr.bf16.gmra.mrb[0].mxu0 %v134
    %v170 = vpop.f32.mrb[0].mxu0
    %v171 = vadd.f32 %v113, %v170
    %v172 = vpop.f32.mrb[0].mxu0
    %v173 = vpop.f32.mrb[0].mxu0
    %v174 = vadd.f32 %v113, %v173
    %v175 = vpop.f32.mrb[0].mxu0
    %176 = vdwg.mxu0
    %v177 = vmax.f32 %v171, 0.0
    %v178 = vmax.f32 %v174, 0.0
    %v179 = vpack.c.bf16 %v178, %v177
    %v180 = vld [vmem:[#allocation8] sm:$0xf]
    %v181 = vld [vmem:[#allocation8 + $0x4] sm:$0xf]
    %v182 = vld [vmem:[#allocation8 + $0x8] sm:$0xf]
    %v183 = vld [vmem:[#allocation8 + $0xc] sm:$0xf]
    %v184 = vld [vmem:[%s5] sm:$0x1]
    %v186 = vlaneseq
    %v187 = vshrl.u32 %v186, 7
    %v188 = vsub.s32 0, %v187
    %v189 = vrot.slane %v184, %v188
    %v195 = vunpack.c.l.b16 %v180
    %v196 = vunpack.c.l.b16 %v181
    %v197 = vunpack.c.l.b16 %v182
    %v198 = vunpack.c.l.b16 %v183
    %v199 = vpack.c.b16 %v196, %v195
    %v200 = vpack.c.b16 %v198, %v197
    %v204 = vsel %vm132, %v179, 0
    %206 = vmatprep.subr.bf16.mxu0 0
    %207 = vmatpush1.bf16.msra.mxu0 %v199
    %208 = vmatprep.subr.bf16.mxu0 0
    %209 = vmatpush1.bf16.msra.mxu0 %v200
    %210 = vmatprep.subr.bf16.mxu0 0
    %211 = vmatpush1.bf16.msra.mxu0 0
    %212 = vmatprep.subr.bf16.mxu0 0
    %213 = vmatpush1.bf16.msra.mxu0 0
    %214 = vmatprep.subr.bf16.mxu0 0
    %215 = vmatpush1.bf16.msra.mxu0 0
    %216 = vmatprep.subr.bf16.mxu0 0
    %217 = vmatpush1.bf16.msra.mxu0 0
    %218 = vmatprep.subr.bf16.mxu0 0
    %219 = vmatpush1.bf16.msra.mxu0 0
    %220 = vmatprep.subr.bf16.mxu0 0
    %221 = vmatpush1.bf16.msra.mxu0 0
    %222 = vmatprep.subr.bf16.mxu0 0
    %223 = vmatpush1.bf16.msra.mxu0 0
    %224 = vmatprep.subr.bf16.mxu0 0
    %225 = vmatpush1.bf16.msra.mxu0 0
    %226 = vmatprep.subr.bf16.mxu0 0
    %227 = vmatpush1.bf16.msra.mxu0 0
    %228 = vmatprep.subr.bf16.mxu0 0
    %229 = vmatpush1.bf16.msra.mxu0 0
    %230 = vmatprep.subr.bf16.mxu0 0
    %231 = vmatpush1.bf16.msra.mxu0 0
    %232 = vmatprep.subr.bf16.mxu0 0
    %233 = vmatpush1.bf16.msra.mxu0 0
    %234 = vmatprep.subr.bf16.mxu0 0
    %235 = vmatpush1.bf16.msra.mxu0 0
    %236 = vmatprep.subr.bf16.mxu0 0
    %237 = vmatpush1.bf16.msra.mxu0 0
    %238 = vmatprep.mubr.bf16.mxu0 0
    %239 = vmatmul.mubr.bf16.gmra.mrb[0].mxu0 %v204
    %v240 = vpop.f32.mrb[0].mxu0
    %v241 = vadd.f32 %v189, %v240
    %v242 = vpop.f32.mrb[0].mxu0
    %v243 = vpop.f32.mrb[0].mxu0
    %v244 = vadd.f32 %v189, %v243
    %v245 = vpop.f32.mrb[0].mxu0
    %246 = vdwg.mxu0
    %v247 = vmax.f32 %v241, 0.0
    %v248 = vmax.f32 %v244, 0.0
    %v249 = vpack.c.bf16 %v248, %v247
    %v250 = vld [vmem:[#allocation10] sm:$0xf]
    %v251 = vld [vmem:[#allocation10 + $0x4] sm:$0xf]
    %v252 = vld [vmem:[#allocation10 + $0x8] sm:$0xf]
    %v253 = vld [vmem:[#allocation10 + $0xc] sm:$0xf]
    %v254 = vld [vmem:[#allocation10 + $0x10] sm:$0xf]
    %v255 = vld [vmem:[#allocation10 + $0x14] sm:$0xf]
    %v256 = vld [vmem:[#allocation10 + $0x18] sm:$0xf]
    %v257 = vld [vmem:[#allocation10 + $0x1c] sm:$0xf]
    %v258 = vld [vmem:[%s7] sm:$0x1]
    %v260 = vlaneseq
    %v261 = vshrl.u32 %v260, 7
    %v262 = vsub.s32 0, %v261
    %v263 = vrot.slane %v258, %v262
    %v273 = vunpack.c.l.b16 %v250
    %v274 = vunpack.c.l.b16 %v251
    %v275 = vunpack.c.l.b16 %v252
    %v276 = vunpack.c.l.b16 %v253
    %v277 = vunpack.c.l.b16 %v254
    %v278 = vunpack.c.l.b16 %v255
    %v279 = vunpack.c.l.b16 %v256
    %v280 = vunpack.c.l.b16 %v257
    %v281 = vpack.c.b16 %v274, %v273
    %v282 = vpack.c.b16 %v276, %v275
    %v283 = vpack.c.b16 %v278, %v277
    %v284 = vpack.c.b16 %v280, %v279
    %vm289 = vcmask 523264
    %v291 = vsel %vm289, %v249, 0
    %293 = vmatprep.subr.bf16.mxu0 0
    %294 = vmatpush1.bf16.msra.mxu0 %v281
    %295 = vmatprep.subr.bf16.mxu0 0
    %296 = vmatpush1.bf16.msra.mxu0 %v282
    %297 = vmatprep.subr.bf16.mxu0 0
    %298 = vmatpush1.bf16.msra.mxu0 %v283
    %299 = vmatprep.subr.bf16.mxu0 0
    %300 = vmatpush1.bf16.msra.mxu0 %v284
    %301 = vmatprep.subr.bf16.mxu0 0
    %302 = vmatpush1.bf16.msra.mxu0 0
    %303 = vmatprep.subr.bf16.mxu0 0
    %304 = vmatpush1.bf16.msra.mxu0 0
    %305 = vmatprep.subr.bf16.mxu0 0
    %306 = vmatpush1.bf16.msra.mxu0 0
    %307 = vmatprep.subr.bf16.mxu0 0
    %308 = vmatpush1.bf16.msra.mxu0 0
    %309 = vmatprep.subr.bf16.mxu0 0
    %310 = vmatpush1.bf16.msra.mxu0 0
    %311 = vmatprep.subr.bf16.mxu0 0
    %312 = vmatpush1.bf16.msra.mxu0 0
    %313 = vmatprep.subr.bf16.mxu0 0
    %314 = vmatpush1.bf16.msra.mxu0 0
    %315 = vmatprep.subr.bf16.mxu0 0
    %316 = vmatpush1.bf16.msra.mxu0 0
    %317 = vmatprep.subr.bf16.mxu0 0
    %318 = vmatpush1.bf16.msra.mxu0 0
    %319 = vmatprep.subr.bf16.mxu0 0
    %320 = vmatpush1.bf16.msra.mxu0 0
    %321 = vmatprep.subr.bf16.mxu0 0
    %322 = vmatpush1.bf16.msra.mxu0 0
    %323 = vmatprep.subr.bf16.mxu0 0
    %324 = vmatpush1.bf16.msra.mxu0 0
    %325 = vmatprep.mubr.bf16.mxu0 0
    %326 = vmatmul.mubr.bf16.gmra.mrb[0].mxu0 %v291
    %v327 = vpop.f32.mrb[0].mxu0
    %v328 = vadd.f32 %v263, %v327
    %v329 = vpop.f32.mrb[0].mxu0
    %v330 = vpop.f32.mrb[0].mxu0
    %v331 = vadd.f32 %v263, %v330
    %v332 = vpop.f32.mrb[0].mxu0
    %333 = vdwg.mxu0
    %v334 = vxor.u32 %v328, 2147483648
    %v335 = vxor.u32 %v331, 2147483648
    %v336 = vmul.f32 %v334, 1.442695
    %v337 = vpow.pop %v336
    %v338 = vmul.f32 %v335, 1.442695
    %v339 = vpow.pop %v338
    %v340 = vadd.f32 %v337, 1.0
    %v341 = vadd.f32 %v339, 1.0
    %v342 = vrcp.pop %v340
    %v343 = vmul.f32 1.0, %v342
    %v344 = vrcp.pop %v341
    %v345 = vmul.f32 1.0, %v344
    %v346 = vpack.c.bf16 %v345, %v343
    %v348 = vunpack.c.l.b16 %v346
    %v349 = vunpack.c.h.b16 %v346
    %v350 = vpack.c.b16 %v348, %v348
    %v351 = vpack.c.b16 %v349, %v349
    %354 = vst [vmem:[#allocation11] sm:$0xf] %v350
    %355 = vst [vmem:[#allocation11 + $0x4] sm:$0xf] %v351
    %v356 = vld [vmem:[#allocation5] sm:$0xff]
    %v357 = vld [vmem:[#allocation5 + $0x8] sm:$0xff]
    %v358 = vmax.f32 %v328, 0.0
    %v359 = vmax.f32 %v331, 0.0
    %v360 = vmul.f32 %v328, %v356
    %v361 = vmul.f32 %v331, %v357
    %v362 = vsub.f32 %v358, %v360
    %v363 = vsub.f32 %v359, %v361
    %v364 = vsub.f32 1.0, %v343
    %v365 = vsub.f32 1.0, %v345
    %v366 = vmax.f32 %v343, %v364
    %v367 = vmax.f32 %v345, %v365
    %v368 = vlog2.pop %v366
    %v369 = vmul.f32 %v368, 0.6931472
    %v370 = vlog2.pop %v367
    %v371 = vmul.f32 %v370, 0.6931472
    %v372 = vsub.f32 %v362, %v369
    %v373 = vsub.f32 %v363, %v371
    %374 = vmatprep.subr.mxu0 0.0
    %375 = vmatpush1.xpose.msra.mxu0 %v372
    %376 = vmatprep.subr.mxu0 0.0
    %377 = vmatpush1.xpose.msra.mxu0 %v373
    %378 = vmatprep.subr.mxu0 0.0
    %379 = vmatpush1.xpose.msra.mxu0 0.0
    %380 = vmatprep.subr.mxu0 0.0
    %381 = vmatpush1.xpose.msra.mxu0 0.0
    %382 = vmatprep.subr.mxu0 0.0
    %383 = vmatpush1.xpose.msra.mxu0 0.0
    %384 = vmatprep.subr.mxu0 0.0
    %385 = vmatpush1.xpose.msra.mxu0 0.0
    %386 = vmatprep.subr.mxu0 0.0
    %387 = vmatpush1.xpose.msra.mxu0 0.0
    %388 = vmatprep.subr.mxu0 0.0
    %389 = vmatpush1.xpose.msra.mxu0 0.0
    %390 = vmatprep.subr.mxu0 0.0
    %391 = vmatpush1.xpose.msra.mxu0 0.0
    %392 = vmatprep.subr.mxu0 0.0
    %393 = vmatpush1.xpose.msra.mxu0 0.0
    %394 = vmatprep.subr.mxu0 0.0
    %395 = vmatpush1.xpose.msra.mxu0 0.0
    %396 = vmatprep.subr.mxu0 0.0
    %397 = vmatpush1.xpose.msra.mxu0 0.0
    %398 = vmatprep.subr.mxu0 0.0
    %399 = vmatpush1.xpose.msra.mxu0 0.0
    %400 = vmatprep.subr.mxu0 0.0
    %401 = vmatpush1.xpose.msra.mxu0 0.0
    %402 = vmatprep.subr.mxu0 0.0
    %403 = vmatpush1.xpose.msra.mxu0 0.0
    %404 = vmatprep.subr.mxu0 0.0
    %405 = vmatpush1.xpose.msra.mxu0 0.0
    %406 = vmatprep.subr.mxu0 0.0
    %407 = vmatpush1.xpose.msra.mxu0 0.0
    %408 = vmatprep.subr.mxu0 0.0
    %409 = vmatpush1.xpose.msra.mxu0 0.0
    %410 = vmatprep.subr.mxu0 0.0
    %411 = vmatpush1.xpose.msra.mxu0 0.0
    %412 = vmatprep.subr.mxu0 0.0
    %413 = vmatpush1.xpose.msra.mxu0 0.0
    %414 = vmatprep.subr.mxu0 0.0
    %415 = vmatpush1.xpose.msra.mxu0 0.0
    %416 = vmatprep.subr.mxu0 0.0
    %417 = vmatpush1.xpose.msra.mxu0 0.0
    %418 = vmatprep.subr.mxu0 0.0
    %419 = vmatpush1.xpose.msra.mxu0 0.0
    %420 = vmatprep.subr.mxu0 0.0
    %421 = vmatpush1.xpose.msra.mxu0 0.0
    %422 = vmatprep.subr.mxu0 0.0
    %423 = vmatpush1.xpose.msra.mxu0 0.0
    %424 = vmatprep.subr.mxu0 0.0
    %425 = vmatpush1.xpose.msra.mxu0 0.0
    %426 = vmatprep.subr.mxu0 0.0
    %427 = vmatpush1.xpose.msra.mxu0 0.0
    %428 = vmatprep.subr.mxu0 0.0
    %429 = vmatpush1.xpose.msra.mxu0 0.0
    %430 = vmatprep.subr.mxu0 0.0
    %431 = vmatpush1.xpose.msra.mxu0 0.0
    %432 = vmatprep.subr.mxu0 0.0
    %433 = vmatpush1.xpose.msra.mxu0 0.0
    %434 = vmatprep.subr.mxu0 0.0
    %435 = vmatpush1.xpose.msra.mxu0 0.0
    %436 = vmatprep.subr.mxu0 0.0
    %437 = vmatpush1.xpose.msra.mxu0 0.0
    %438 = vmatprep.mubr.f32.mxu0 0.0
    %439 = vmatmul.mubr.f32.gmra.mrb[0].mxu0 1.0
    %v440 = vpop.f32.mrb[0].mxu0
    %v441 = vadd.f32 0.0, %v440
    %v442 = vpop.f32.mrb[0].mxu0
    %443 = vdwg.mxu0
    %vm444 = vcmask 122880
    %445 = vst.msk [vmem:[#allocation12] sm:$0x1] %vm444, %v441
    // Predicated region
    $region54: #{tpu_custom_call.1} parent=1 // pred_check
      _
    $region55: #{tpu_custom_call.1} parent=1 // pred_check_branch
      %447 = sbr.rel (0) target = $region57
    $region56: #{tpu_custom_call.1} parent=1 // pred_region
      %s449 = ssub.s32 128, 128
      %450 = vsyncadd [#allocation4], %s449
      %s451 = sshll.u32 [#allocation11], 4
      %s452 = int_to_ptr.vmem [resolvable:$true] %s451
      %457 = dma.vmem_to_hbm [thread:$0]  %s452, 128, %s8, [#allocation4], 64, 64, 4
    $region57: #{tpu_custom_call.1} parent=1 // pred_fallthru
      _
    // Predicated region
    $region58: #{tpu_custom_call.1} parent=1 // pred_check
      _
    $region59: #{tpu_custom_call.1} parent=1 // pred_check_branch
      %459 = sbr.rel (0) target = $region61
    $region60: #{tpu_custom_call.1} parent=1 // pred_region
      %s461 = ssub.s32 16, 16
      %462 = vsyncadd [#allocation13], %s461
      %s464 = sshll.u32 [#allocation12], 4
      %s465 = int_to_ptr.vmem [resolvable:$true] %s464
      %467 = dma.vmem_to_hbm [thread:$0]  %s465, 16, %s9, [#allocation13]
    $region61: #{tpu_custom_call.1} parent=1 // pred_fallthru
      _
    // Predicated region
    $region62: #{tpu_custom_call.1} parent=1 // pred_check
      _
    $region63: #{tpu_custom_call.1} parent=1 // pred_check_branch
      %469 = sbr.rel (0) target = $region65
    $region64: #{tpu_custom_call.1} parent=1 // pred_region
      %470 = dma.done [#allocation4], 128
    $region65: #{tpu_custom_call.1} parent=1 // pred_fallthru
      _
    // Predicated region
    $region66: #{tpu_custom_call.1} parent=1 // pred_check
      _
    $region67: #{tpu_custom_call.1} parent=1 // pred_check_branch
      %472 = sbr.rel (0) target = $region69
    $region68: #{tpu_custom_call.1} parent=1 // pred_region
      %473 = dma.done [#allocation13], 16
    $region69: #{tpu_custom_call.1} parent=1 // pred_fallthru
      _
    %474 = vsyncpa [#allocation3], 1
    %475 = vsyncpa [#allocation6], 1
    %476 = vsyncpa [#allocation9], 1
    %477 = vsyncpa [#allocation4], 1
    %478 = vsyncpa [#allocation13], 1

</llo_original>
